<compile_context>
chip_gen: v5e
topology: v5e:2x2
jax: 0.10.0
libtpu: 0.0.40
codegen_flags: <defaults>
</compile_context>

<pallas_src>
import functools

import jax
import jax.numpy as jnp
from jax.experimental import pallas as pl
from jax.experimental.pallas import tpu as pltpu

_EPS = 1e-5  # nn.BatchNorm2d default


def _stats_kernel(x_ref, w_ref, b_ref, scale_ref, shift_ref,
                  sum_ref, sq_ref, *, inv_count):
    """Pass 1: accumulate per-channel sum / sumsq, finalize fused scale/shift.

    x_ref: (C_TILE, L_TILE)   w_ref/b_ref: (C_TILE, 1)
    scale_ref/shift_ref: (C_TILE, 1) outputs (resident across N/L axes)
    sum_ref/sq_ref: (C_TILE, 1) f32 VMEM scratch accumulators
    """
    n_idx = pl.program_id(1)
    l_idx = pl.program_id(2)

    @pl.when((n_idx == 0) & (l_idx == 0))
    def _():
        sum_ref[...] = jnp.zeros_like(sum_ref)
        sq_ref[...] = jnp.zeros_like(sq_ref)

    x = x_ref[...].astype(jnp.float32)
    # Lane-axis reductions go to the XLU — free filler in a mem-bound kernel.
    sum_ref[...] += jnp.sum(x, axis=-1, keepdims=True)
    sq_ref[...] += jnp.sum(x * x, axis=-1, keepdims=True)

    is_last = ((n_idx == pl.num_programs(1) - 1) &
               (l_idx == pl.num_programs(2) - 1))

    @pl.when(is_last)
    def _():
        mean = sum_ref[...] * inv_count
        var = sq_ref[...] * inv_count - mean * mean
        var = jnp.maximum(var, 0.0)            # guard fp cancellation
        inv = jax.lax.rsqrt(var + _EPS)        # EUP, once per channel
        scale = w_ref[...] * inv
        scale_ref[...] = scale
        shift_ref[...] = b_ref[...] - mean * scale


def _norm_kernel(x_ref, scale_ref, shift_ref, o_ref):
    """Pass 2: y = x * scale + shift (single FMA per element)."""
    x = x_ref[...].astype(jnp.float32)
    o_ref[...] = (x * scale_ref[...] + shift_ref[...]).astype(o_ref.dtype)


def _pick_tile(dim, candidates):
    """Largest candidate that evenly divides `dim`, else the full dim."""
    for t in candidates:
        if dim % t == 0:
            return t
    return dim


def dual_norm_layer(x, weight, bias, clean_input=True):
    """Forward of DualNormLayer. x: (N, C, H, W); weight, bias: (C,)."""
    # TODO(synk): tensor-valued clean_input (per-sample clean/noise split via
    # torch.nonzero) needs data-dependent gather/scatter; only the bool path
    # is implemented (both affine=False BN branches are identical math here).
    del clean_input

    N, C, H, W = x.shape
    HW = H * W
    count = N * HW

    # Contiguous reshape (no XLA transpose, no extra HBM traffic).
    x3 = x.reshape(N, C, HW)
    w = weight.reshape(C, 1).astype(jnp.float32)
    b = bias.reshape(C, 1).astype(jnp.float32)

    # Tile sizes: lane dim a large multiple of 128 (or full HW), sublane dim a
    # multiple of 8 (or full C). Tiles must divide exactly so the reduction
    # never sums out-of-bounds padding.
    c_tile = _pick_tile(C, (128, 64, 32, 16, 8))
    l_tile = _pick_tile(HW, (2048, 1024, 512, 256, 128))
    grid = (C // c_tile, N, HW // l_tile)

    x_spec = pl.BlockSpec((pl.Squeezed(), c_tile, l_tile),
                          lambda ci, n, li: (n, ci, li))
    # Per-channel vectors: block index constant across the N/L axes, so they
    # stay VMEM-resident instead of being re-DMA'd every grid step.
    cvec_spec = pl.BlockSpec((c_tile, 1), lambda ci, n, li: (ci, 0))

    # Pass 1: streaming statistics -> fused per-channel scale / shift.
    scale, shift = pl.pallas_call(
        functools.partial(_stats_kernel, inv_count=1.0 / float(count)),
        out_shape=(jax.ShapeDtypeStruct((C, 1), jnp.float32),
                   jax.ShapeDtypeStruct((C, 1), jnp.float32)),
        grid=grid,
        in_specs=[x_spec, cvec_spec, cvec_spec],
        out_specs=(cvec_spec, cvec_spec),
        scratch_shapes=[pltpu.VMEM((c_tile, 1), jnp.float32),
                        pltpu.VMEM((c_tile, 1), jnp.float32)],
        compiler_params=pltpu.CompilerParams(
            dimension_semantics=("parallel", "arbitrary", "arbitrary")),
    )(x3, w, b)

    # Pass 2: normalize, streamed in the same native layout (lane-dense out).
    out = pl.pallas_call(
        _norm_kernel,
        out_shape=jax.ShapeDtypeStruct((N, C, HW), x.dtype),
        grid=grid,
        in_specs=[x_spec, cvec_spec, cvec_spec],
        out_specs=x_spec,
        compiler_params=pltpu.CompilerParams(
            dimension_semantics=("parallel", "parallel", "arbitrary")),
    )(x3, scale, shift)

    return out.reshape(N, C, H, W)


def _reference(x, weight, bias):
    # Pure-JAX reference: BatchNorm2d(training, affine=False) + shared affine.
    mean = jnp.mean(x, axis=(0, 2, 3), keepdims=True)
    var = jnp.mean((x - mean) ** 2, axis=(0, 2, 3), keepdims=True)
    y = (x - mean) * jax.lax.rsqrt(var + _EPS)
    return y * weight.reshape(1, -1, 1, 1) + bias.reshape(1, -1, 1, 1)


if __name__ == "__main__":
    key = jax.random.PRNGKey(0)
    N, C, H, W = 2, 4, 16, 16
    x = jax.random.normal(key, (N, C, H, W), dtype=jnp.float32)

    # Deterministic parameter init matching reset_parameters():
    # shared affine weight = ones, bias = zeros.
    weight = jnp.ones((C,), dtype=jnp.float32)
    bias = jnp.zeros((C,), dtype=jnp.float32)

    out = dual_norm_layer(x, weight, bias, clean_input=True)
    out = jax.block_until_ready(out)

    ref = _reference(x, weight, bias)
    assert out.shape == x.shape
    assert jnp.allclose(out, ref, atol=1e-4, rtol=1e-4)
    print("KERNEL_OK")
</pallas_src>

<mosaic_0001>
module attributes {stable_mosaic.version = 11 : i64} {
  func.func @_stats_kernel(%arg0: i32, %arg1: i32, %arg2: i32, %arg3: memref<1x4x256xf32, #tpu.memory_space<vmem>>, %arg4: memref<4x1xf32, #tpu.memory_space<vmem>>, %arg5: memref<4x1xf32, #tpu.memory_space<vmem>>, %arg6: memref<4x1xf32, #tpu.memory_space<vmem>>, %arg7: memref<4x1xf32, #tpu.memory_space<vmem>>, %arg8: memref<4x1xf32, #tpu.memory_space<vmem>>, %arg9: memref<4x1xf32, #tpu.memory_space<vmem>>) attributes {dimension_semantics = [#tpu.dimension_semantics<parallel>, #tpu.dimension_semantics<arbitrary>, #tpu.dimension_semantics<arbitrary>], iteration_bounds = array<i64: 1, 2, 1>, scalar_prefetch = 0 : i64, scratch_operands = 2 : i64, tpu.core_type = #tpu.core_type<tc>, window_params = [{transform_indices = @transform_0, window_bounds = array<i64: 1, 4, 256>}, {transform_indices = @transform_1, window_bounds = array<i64: 4, 1>}, {transform_indices = @transform_2, window_bounds = array<i64: 4, 1>}, {transform_indices = @transform_3, window_bounds = array<i64: 4, 1>}, {transform_indices = @transform_4, window_bounds = array<i64: 4, 1>}]} {
    %c0_i32 = arith.constant 0 : i32
    %0 = arith.cmpi eq, %arg1, %c0_i32 : i32
    %c0_i32_0 = arith.constant 0 : i32
    %1 = arith.cmpi eq, %arg2, %c0_i32_0 : i32
    %2 = arith.andi %0, %1 : i1
    %3 = arith.extui %2 : i1 to i32
    %c0_i32_1 = arith.constant 0 : i32
    %4 = arith.cmpi ne, %3, %c0_i32_1 : i32
    scf.if %4 {
      %cst_15 = arith.constant 0.000000e+00 : f32
      %23 = vector.broadcast %cst_15 : f32 to vector<4x1xf32>
      %c0_16 = arith.constant 0 : index
      %c0_17 = arith.constant 0 : index
      %24 = vector.load %arg8[%c0_16, %c0_17] : memref<4x1xf32, #tpu.memory_space<vmem>>, vector<4x1xf32>
      tpu.vector_store %arg8[%c0_16, %c0_17], %23 {strides = array<i32>} : memref<4x1xf32, #tpu.memory_space<vmem>>, vector<4x1xf32>,
      %cst_18 = arith.constant 0.000000e+00 : f32
      %25 = vector.broadcast %cst_18 : f32 to vector<4x1xf32>
      %c0_19 = arith.constant 0 : index
      %c0_20 = arith.constant 0 : index
      %26 = vector.load %arg9[%c0_19, %c0_20] : memref<4x1xf32, #tpu.memory_space<vmem>>, vector<4x1xf32>
      tpu.vector_store %arg9[%c0_19, %c0_20], %25 {strides = array<i32>} : memref<4x1xf32, #tpu.memory_space<vmem>>, vector<4x1xf32>,
    } else {
    }
    %c0 = arith.constant 0 : index
    %c0_2 = arith.constant 0 : index
    %c0_3 = arith.constant 0 : index
    %5 = vector.load %arg3[%c0, %c0_2, %c0_3] : memref<1x4x256xf32, #tpu.memory_space<vmem>>, vector<1x4x256xf32>
    %6 = vector.shape_cast %5 : vector<1x4x256xf32> to vector<4x256xf32>
    %c0_4 = arith.constant 0 : index
    %c0_5 = arith.constant 0 : index
    %7 = vector.load %arg8[%c0_4, %c0_5] : memref<4x1xf32, #tpu.memory_space<vmem>>, vector<4x1xf32>
    %cst = arith.constant dense<0.000000e+00> : vector<4xf32>
    %8 = vector.multi_reduction <add>, %6, %cst [1] : vector<4x256xf32> to vector<4xf32>
    %9 = vector.shape_cast %8 : vector<4xf32> to vector<4x1xf32>
    %10 = arith.addf %7, %9 : vector<4x1xf32>
    %c0_6 = arith.constant 0 : index
    %c0_7 = arith.constant 0 : index
    %11 = vector.load %arg8[%c0_6, %c0_7] : memref<4x1xf32, #tpu.memory_space<vmem>>, vector<4x1xf32>
    tpu.vector_store %arg8[%c0_6, %c0_7], %10 {strides = array<i32>} : memref<4x1xf32, #tpu.memory_space<vmem>>, vector<4x1xf32>,
    %c0_8 = arith.constant 0 : index
    %c0_9 = arith.constant 0 : index
    %12 = vector.load %arg9[%c0_8, %c0_9] : memref<4x1xf32, #tpu.memory_space<vmem>>, vector<4x1xf32>
    %13 = arith.mulf %6, %6 : vector<4x256xf32>
    %cst_10 = arith.constant dense<0.000000e+00> : vector<4xf32>
    %14 = vector.multi_reduction <add>, %13, %cst_10 [1] : vector<4x256xf32> to vector<4xf32>
    %15 = vector.shape_cast %14 : vector<4xf32> to vector<4x1xf32>
    %16 = arith.addf %12, %15 : vector<4x1xf32>
    %c0_11 = arith.constant 0 : index
    %c0_12 = arith.constant 0 : index
    %17 = vector.load %arg9[%c0_11, %c0_12] : memref<4x1xf32, #tpu.memory_space<vmem>>, vector<4x1xf32>
    tpu.vector_store %arg9[%c0_11, %c0_12], %16 {strides = array<i32>} : memref<4x1xf32, #tpu.memory_space<vmem>>, vector<4x1xf32>,
    %c1_i32 = arith.constant 1 : i32
    %18 = arith.cmpi eq, %arg1, %c1_i32 : i32
    %c0_i32_13 = arith.constant 0 : i32
    %19 = arith.cmpi eq, %arg2, %c0_i32_13 : i32
    %20 = arith.andi %18, %19 : i1
    %21 = arith.extui %20 : i1 to i32
    %c0_i32_14 = arith.constant 0 : i32
    %22 = arith.cmpi ne, %21, %c0_i32_14 : i32
    scf.if %22 {
      %c0_15 = arith.constant 0 : index
      %c0_16 = arith.constant 0 : index
      %23 = vector.load %arg8[%c0_15, %c0_16] : memref<4x1xf32, #tpu.memory_space<vmem>>, vector<4x1xf32>
      %cst_17 = arith.constant 0.001953125 : f32
      %24 = vector.broadcast %cst_17 : f32 to vector<4x1xf32>
      %25 = arith.mulf %23, %24 : vector<4x1xf32>
      %c0_18 = arith.constant 0 : index
      %c0_19 = arith.constant 0 : index
      %26 = vector.load %arg9[%c0_18, %c0_19] : memref<4x1xf32, #tpu.memory_space<vmem>>, vector<4x1xf32>
      %cst_20 = arith.constant 0.001953125 : f32
      %27 = vector.broadcast %cst_20 : f32 to vector<4x1xf32>
      %28 = arith.mulf %26, %27 : vector<4x1xf32>
      %29 = arith.mulf %25, %25 : vector<4x1xf32>
      %30 = arith.subf %28, %29 : vector<4x1xf32>
      %cst_21 = arith.constant 0.000000e+00 : f32
      %31 = vector.broadcast %cst_21 : f32 to vector<4x1xf32>
      %32 = arith.maximumf %30, %31 : vector<4x1xf32>
      %cst_22 = arith.constant 9.99999974E-6 : f32
      %33 = vector.broadcast %cst_22 : f32 to vector<4x1xf32>
      %34 = arith.addf %32, %33 : vector<4x1xf32>
      %35 = math.rsqrt %34 : vector<4x1xf32>
      %c0_23 = arith.constant 0 : index
      %c0_24 = arith.constant 0 : index
      %36 = vector.load %arg4[%c0_23, %c0_24] : memref<4x1xf32, #tpu.memory_space<vmem>>, vector<4x1xf32>
      %37 = arith.mulf %36, %35 : vector<4x1xf32>
      %c0_25 = arith.constant 0 : index
      %c0_26 = arith.constant 0 : index
      %38 = vector.load %arg6[%c0_25, %c0_26] : memref<4x1xf32, #tpu.memory_space<vmem>>, vector<4x1xf32>
      tpu.vector_store %arg6[%c0_25, %c0_26], %37 {strides = array<i32>} : memref<4x1xf32, #tpu.memory_space<vmem>>, vector<4x1xf32>,
      %c0_27 = arith.constant 0 : index
      %c0_28 = arith.constant 0 : index
      %39 = vector.load %arg5[%c0_27, %c0_28] : memref<4x1xf32, #tpu.memory_space<vmem>>, vector<4x1xf32>
      %40 = arith.mulf %25, %37 : vector<4x1xf32>
      %41 = arith.subf %39, %40 : vector<4x1xf32>
      %c0_29 = arith.constant 0 : index
      %c0_30 = arith.constant 0 : index
      %42 = vector.load %arg7[%c0_29, %c0_30] : memref<4x1xf32, #tpu.memory_space<vmem>>, vector<4x1xf32>
      tpu.vector_store %arg7[%c0_29, %c0_30], %41 {strides = array<i32>} : memref<4x1xf32, #tpu.memory_space<vmem>>, vector<4x1xf32>,
    } else {
    }
    return
  }
  func.func @transform_0(%arg0: i32, %arg1: i32, %arg2: i32) -> (i32, i32, i32) {
    %c0_i32 = arith.constant 0 : i32
    return %arg1, %arg0, %arg2 : i32, i32, i32
  }
  func.func @transform_1(%arg0: i32, %arg1: i32, %arg2: i32) -> (i32, i32) {
    %c0_i32 = arith.constant 0 : i32
    %c0_i32_0 = arith.constant 0 : i32
    return %arg0, %c0_i32 : i32, i32
  }
  func.func @transform_2(%arg0: i32, %arg1: i32, %arg2: i32) -> (i32, i32) {
    %c0_i32 = arith.constant 0 : i32
    %c0_i32_0 = arith.constant 0 : i32
    return %arg0, %c0_i32 : i32, i32
  }
  func.func @transform_3(%arg0: i32, %arg1: i32, %arg2: i32) -> (i32, i32) {
    %c0_i32 = arith.constant 0 : i32
    %c0_i32_0 = arith.constant 0 : i32
    return %arg0, %c0_i32 : i32, i32
  }
  func.func @transform_4(%arg0: i32, %arg1: i32, %arg2: i32) -> (i32, i32) {
    %c0_i32 = arith.constant 0 : i32
    %c0_i32_0 = arith.constant 0 : i32
    return %arg0, %c0_i32 : i32, i32
  }
}

</mosaic_0001>

<llo_original>
// kernel: tpu_custom_call.1
$region0: #{tpu_custom_call.1}
  #allocation0 [shape = 'u32[]', space=smem, size = 0x4, offset = 0x4, fixed_abs, tag = 'smem constant byte address 0x4 - core index']
  #allocation1 [shape = 'u32[72,128]{1,0:T(1,128)}', space=vmem, size = 0x9000, scoped, tag = 'internal scratch']
  #allocation2 [shape = 'f32[4,1]{1,0:T(4,128)}', space=vmem, size = 0x800, scoped, tag = 'scratch operand']
  #allocation3 [shape = 'f32[4,1]{1,0:T(4,128)}', space=vmem, size = 0x800, scoped, tag = 'scratch operand']
  %s0 = inlined_call_operand.hbm [shape: f32[2,4,256], index: 0, kind: input, shape index: {}]
  %s1 = inlined_call_operand.vmem [shape: f32[4,1], index: 1, kind: input, shape index: {}]
  %s2 = inlined_call_operand.vmem [shape: f32[4,1], index: 2, kind: input, shape index: {}]
  %s3 = inlined_call_operand.vmem [shape: f32[4,1], index: 3, kind: output, shape index: {0}]
  %s4 = inlined_call_operand.vmem [shape: f32[4,1], index: 4, kind: output, shape index: {1}]
  %5 = xla_tuple %s3, %s4
  %s6 = sld [smem:[#allocation0]]
  $region65: #{tpu_custom_call.1} parent=0
    _
  %s8 = ssub.s32 1, %s6
  %s9 = scalar_select 0, %s8, %s6
  $region1: #{tpu_custom_call.1} parent=0
    #allocation4 [shape = 'u8[8192]{0}', space=vmem, size = 0x2000, scoped, tag = 'input window, operand 0']
    #allocation5 [shape = 's32[2]{0}', space=sflag, size = 0x8, scoped, tag = 'scoped memory for tpu_custom_call.1']
    %10 = vsyncpa [#allocation5], 0
    %s11 = scalar_lea.sflag [#allocation5], 1
    %12 = vsyncpa %s11, 0
    loop: start=0, step=1, limit=4
    $region2: #{tpu_custom_call.1} parent=1 // loop_pre_header
      _
    $region3: #{tpu_custom_call.1} parent=1 // loop_header
      %s14 = sphi 0, %s18
      %p15 = scmp.ge.s32.totalorder %s14, 4
      %s21 = sphi 0, %s40
      %s22 = sphi 0, %s36
      %s23 = sphi 0, %s32
      %s24 = sphi 0, %s21
      %s25 = sphi 0, %s22
      %s26 = sphi 0, %s23
      %s27 = sphi 0, %s24
      %s28 = sphi 0, %s25
      %s29 = sphi 0, %s26
      %s47 = sphi 0, %s49
      %s50 = sphi 0, %s47
      %s51 = sphi 0, %s50
      %s67 = sphi 0, %s51
      %s73 = sphi 0, %s75
      %s76 = sphi 0, %s73
      %s77 = sphi 0, %s76
      %s93 = sphi 0, %s77
      %s99 = sphi 0, %s101
      %s102 = sphi 0, %s99
      %s103 = sphi 0, %s102
      %s119 = sphi 0, %s103
      %s125 = sphi 0, %s127
      %s128 = sphi 0, %s125
      %s129 = sphi 0, %s128
      %s145 = sphi 0, %s129
      %s151 = sphi 0, %s153
      %s154 = sphi 0, %s151
      %s155 = sphi 0, %s154
      %s171 = sphi 0, %s155
    $region4: #{tpu_custom_call.1} parent=1 // loop_header_branch
      %17 = sbr.rel (%p15) target = $region8
    $region5: #{tpu_custom_call.1} parent=1 // loop_body
      %s19 = ssub.s32 %s14, 1
      %s20 = ssub.s32 %s14, 2
      %s30 = sadd.s32 1, %s23
      %p31 = scmp.ge.s32.totalorder %s30, 1
      %s32 = scalar_select %p31, 0, %s30
      %s33 = sadd.s32 1, %s22
      %s34 = scalar_select %p31, %s33, %s22
      %p35 = scmp.ge.s32.totalorder %s34, 2
      %s36 = scalar_select %p35, 0, %s34
      %s37 = sadd.s32 1, %s21
      %s38 = scalar_select %p35, %s37, %s21
      %p39 = scmp.ge.s32.totalorder %s38, 1
      %s40 = scalar_select %p39, 0, %s38
      %s41 = ssub.s32 %s22, %s36
      %s42 = ssub.s32 %s21, %s40
      %s43 = sor.u32 %s41, %s42
      %s44 = ssub.s32 %s23, %s32
      %s45 = sor.u32 %s43, %s44
      %p46 = scmp.eq.s32.totalorder %s45, 0
      %s48 = sadd.s32 %s47, 1
      %s49 = scalar_select %p46, %s47, %s48
      %p52 = pneg %p46
      %p53 = scmp.eq.s32.totalorder %s14, 1
      %p54 = por %p52, %p53
      %p55 = scmp.ne.s32.totalorder %s47, %s50
      %p56 = scmp.eq.s32.totalorder %s14, 0
      %p57 = por %p55, %p56
      %p58 = scmp.ne.s32.totalorder %s47, %s50
      %p59 = scmp.eq.s32.totalorder %s19, 1
      %p60 = por %p58, %p59
      %p61 = scmp.ne.s32.totalorder %s50, %s51
      %p62 = scmp.eq.s32.totalorder %s19, 0
      %p63 = por %p61, %p62
      %p64 = scmp.ne.s32.totalorder %s50, %s51
      %p65 = scmp.eq.s32.totalorder %s20, 1
      %p66 = por %p64, %p65
      %p68 = scmp.ne.s32.totalorder %s51, %s67
      %p69 = scmp.eq.s32.totalorder %s20, 0
      %p70 = por %p68, %p69
      %s71 = ssub.s32 %s21, %s40
      %p72 = scmp.eq.s32.totalorder %s71, 0
      %s74 = sadd.s32 %s73, 1
      %s75 = scalar_select %p72, %s73, %s74
      %p78 = pneg %p72
      %p79 = scmp.eq.s32.totalorder %s14, 1
      %p80 = por %p78, %p79
      %p81 = scmp.ne.s32.totalorder %s73, %s76
      %p82 = scmp.eq.s32.totalorder %s14, 0
      %p83 = por %p81, %p82
      %p84 = scmp.ne.s32.totalorder %s73, %s76
      %p85 = scmp.eq.s32.totalorder %s19, 1
      %p86 = por %p84, %p85
      %p87 = scmp.ne.s32.totalorder %s76, %s77
      %p88 = scmp.eq.s32.totalorder %s19, 0
      %p89 = por %p87, %p88
      %p90 = scmp.ne.s32.totalorder %s76, %s77
      %p91 = scmp.eq.s32.totalorder %s20, 1
      %p92 = por %p90, %p91
      %p94 = scmp.ne.s32.totalorder %s77, %s93
      %p95 = scmp.eq.s32.totalorder %s20, 0
      %p96 = por %p94, %p95
      %s97 = ssub.s32 %s21, %s40
      %p98 = scmp.eq.s32.totalorder %s97, 0
      %s100 = sadd.s32 %s99, 1
      %s101 = scalar_select %p98, %s99, %s100
      %p104 = pneg %p98
      %p105 = scmp.eq.s32.totalorder %s14, 1
      %p106 = por %p104, %p105
      %p107 = scmp.ne.s32.totalorder %s99, %s102
      %p108 = scmp.eq.s32.totalorder %s14, 0
      %p109 = por %p107, %p108
      %p110 = scmp.ne.s32.totalorder %s99, %s102
      %p111 = scmp.eq.s32.totalorder %s19, 1
      %p112 = por %p110, %p111
      %p113 = scmp.ne.s32.totalorder %s102, %s103
      %p114 = scmp.eq.s32.totalorder %s19, 0
      %p115 = por %p113, %p114
      %p116 = scmp.ne.s32.totalorder %s102, %s103
      %p117 = scmp.eq.s32.totalorder %s20, 1
      %p118 = por %p116, %p117
      %p120 = scmp.ne.s32.totalorder %s103, %s119
      %p121 = scmp.eq.s32.totalorder %s20, 0
      %p122 = por %p120, %p121
      %s123 = ssub.s32 %s21, %s40
      %p124 = scmp.eq.s32.totalorder %s123, 0
      %s126 = sadd.s32 %s125, 1
      %s127 = scalar_select %p124, %s125, %s126
      %p130 = pneg %p124
      %p131 = scmp.eq.s32.totalorder %s14, 1
      %p132 = por %p130, %p131
      %p133 = scmp.ne.s32.totalorder %s125, %s128
      %p134 = scmp.eq.s32.totalorder %s14, 0
      %p135 = por %p133, %p134
      %p136 = scmp.ne.s32.totalorder %s125, %s128
      %p137 = scmp.eq.s32.totalorder %s19, 1
      %p138 = por %p136, %p137
      %p139 = scmp.ne.s32.totalorder %s128, %s129
      %p140 = scmp.eq.s32.totalorder %s19, 0
      %p141 = por %p139, %p140
      %p142 = scmp.ne.s32.totalorder %s128, %s129
      %p143 = scmp.eq.s32.totalorder %s20, 1
      %p144 = por %p142, %p143
      %p146 = scmp.ne.s32.totalorder %s129, %s145
      %p147 = scmp.eq.s32.totalorder %s20, 0
      %p148 = por %p146, %p147
      %s149 = ssub.s32 %s21, %s40
      %p150 = scmp.eq.s32.totalorder %s149, 0
      %s152 = sadd.s32 %s151, 1
      %s153 = scalar_select %p150, %s151, %s152
      %p156 = pneg %p150
      %p157 = scmp.eq.s32.totalorder %s14, 1
      %p158 = por %p156, %p157
      %p159 = scmp.ne.s32.totalorder %s151, %s154
      %p160 = scmp.eq.s32.totalorder %s14, 0
      %p161 = por %p159, %p160
      %p162 = scmp.ne.s32.totalorder %s151, %s154
      %p163 = scmp.eq.s32.totalorder %s19, 1
      %p164 = por %p162, %p163
      %p165 = scmp.ne.s32.totalorder %s154, %s155
      %p166 = scmp.eq.s32.totalorder %s19, 0
      %p167 = por %p165, %p166
      %p168 = scmp.ne.s32.totalorder %s154, %s155
      %p169 = scmp.eq.s32.totalorder %s20, 1
      %p170 = por %p168, %p169
      %p172 = scmp.ne.s32.totalorder %s155, %s171
      %p173 = scmp.eq.s32.totalorder %s20, 0
      %p174 = por %p172, %p173
      %p175 = scmp.le.s32.totalorder 1, %s14
      %p176 = scmp.lt.s32.totalorder %s14, 3
      %p177 = pnand %p175, %p176
      %p178 = pneg %p177
      // Predicated region
      $region9: #{tpu_custom_call.1} parent=5 // pred_check
        _
      $region10: #{tpu_custom_call.1} parent=5 // pred_check_branch
        %180 = sbr.rel (%p177) target = $region12
      $region11: #{tpu_custom_call.1} parent=5 // pred_region
        %s181 = ssub.s32 %s14, 1
        // Predicated region
        $region13: #{tpu_custom_call.1} parent=11 // pred_check
          %p182 = pneg %p89
        $region14: #{tpu_custom_call.1} parent=11 // pred_check_branch
          %184 = sbr.rel (%p182) target = $region16
        $region15: #{tpu_custom_call.1} parent=11 // pred_region
          %p185 = scmp.lt.s32.totalorder %s24, 0
          %s186 = scalar_select %p185, %s24, 0
          %s187 = smul.addr %s186, 4
          %s188 = scalar_lea.vmem %s1, %s187
        $region16: #{tpu_custom_call.1} parent=11 // pred_fallthru
          _
        // Predicated region
        $region17: #{tpu_custom_call.1} parent=11 // pred_check
          %p189 = pneg %p115
        $region18: #{tpu_custom_call.1} parent=11 // pred_check_branch
          %191 = sbr.rel (%p189) target = $region20
        $region19: #{tpu_custom_call.1} parent=11 // pred_region
          %p192 = scmp.lt.s32.totalorder %s24, 0
          %s193 = scalar_select %p192, %s24, 0
          %s194 = smul.addr %s193, 4
          %s195 = scalar_lea.vmem %s2, %s194
        $region20: #{tpu_custom_call.1} parent=11 // pred_fallthru
          _
      $region12: #{tpu_custom_call.1} parent=5 // pred_fallthru
        _
      %p196 = scmp.lt.s32.totalorder %s14, 2
      // Predicated region
      $region21: #{tpu_custom_call.1} parent=5 // pred_check
        %p197 = pneg %p196
      $region22: #{tpu_custom_call.1} parent=5 // pred_check_branch
        %199 = sbr.rel (%p197) target = $region24
      $region23: #{tpu_custom_call.1} parent=5 // pred_region
        // Predicated region
        $region25: #{tpu_custom_call.1} parent=23 // pred_check
          %p200 = pneg %p57
        $region26: #{tpu_custom_call.1} parent=23 // pred_check_branch
          %202 = sbr.rel (%p200) target = $region28
        $region27: #{tpu_custom_call.1} parent=23 // pred_region
          %s203 = sand.u32 %s47, 1
          %s204 = scalar_lea.sflag [#allocation5], %s203
          %s205 = sand.u32 %s47, 1
          %s206 = smul.addr %s205, 8
          %s207 = scalar_lea.vmem [#allocation4], %s206
          %s208 = smul.u32 2, %s23
          %210 = vsyncadd %s204, 0
          %s211 = smul.addr %s21, 2
          %s212 = sadd.s32 %s208, %s211
          %s213 = smul.addr %s22, 2
          %s214 = sadd.s32 %s212, %s213
          %s215 = smul.addr %s214, 4
          %s216 = scalar_lea.hbm %s0, %s215
          %s218 = sshll.u32 %s216, 4
          %s219 = int_to_ptr.hbm [resolvable:$true] %s218
          %s220 = sshll.u32 %s207, 4
          %s221 = int_to_ptr.vmem [resolvable:$true] %s220
          %223 = dma.hbm_to_vmem [thread:$0]  %s219, 128, %s221, %s204
        $region28: #{tpu_custom_call.1} parent=23 // pred_fallthru
          _
      $region24: #{tpu_custom_call.1} parent=5 // pred_fallthru
        _
      %p224 = scmp.le.s32.totalorder 1, %s14
      %p225 = scmp.lt.s32.totalorder %s14, 3
      %p226 = pnand %p224, %p225
      %p227 = pneg %p226
      // Predicated region
      $region29: #{tpu_custom_call.1} parent=5 // pred_check
        _
      $region30: #{tpu_custom_call.1} parent=5 // pred_check_branch
        %229 = sbr.rel (%p226) target = $region32
      $region31: #{tpu_custom_call.1} parent=5 // pred_region
        %s230 = ssub.s32 %s14, 1
        %s231 = sand.u32 %s50, 1
        %s232 = scalar_lea.sflag [#allocation5], %s231
        %s233 = sand.u32 %s50, 1
        %s234 = smul.addr %s233, 8
        %s235 = scalar_lea.vmem [#allocation4], %s234
        // Predicated region
        $region33: #{tpu_custom_call.1} parent=31 // pred_check
          %p236 = pneg %p63
        $region34: #{tpu_custom_call.1} parent=31 // pred_check_branch
          %238 = sbr.rel (%p236) target = $region36
        $region35: #{tpu_custom_call.1} parent=31 // pred_region
          %240 = dma.done %s232, 128
        $region36: #{tpu_custom_call.1} parent=31 // pred_fallthru
          _
        %s241 = sand.u32 %s50, 1
        %s242 = scalar_lea.sflag [#allocation5], %s241
        %s243 = sand.u32 %s50, 1
        %s244 = smul.addr %s243, 8
        %s245 = scalar_lea.vmem [#allocation4], %s244
        %p246 = pneg %p63
        %p247 = pneg %p60
        %p248 = scmp.lt.s32.totalorder %s24, 0
        %s249 = scalar_select %p248, %s24, 0
        %s250 = smul.addr %s249, 4
        %s251 = scalar_lea.vmem %s1, %s250
        %p252 = pneg %p89
        %p253 = pneg %p86
        %p254 = scmp.lt.s32.totalorder %s24, 0
        %s255 = scalar_select %p254, %s24, 0
        %s256 = smul.addr %s255, 4
        %s257 = scalar_lea.vmem %s2, %s256
        %p258 = pneg %p115
        %p259 = pneg %p112
        %p260 = pneg %p141
        %p261 = pneg %p138
        %p262 = scmp.lt.s32.totalorder %s24, 0
        %s263 = scalar_select %p262, %s24, 0
        %s264 = smul.addr %s263, 4
        %s265 = scalar_lea.vmem %s3, %s264
        %p266 = pneg %p167
        %p267 = pneg %p164
        %p268 = scmp.lt.s32.totalorder %s24, 0
        %s269 = scalar_select %p268, %s24, 0
        %s270 = smul.addr %s269, 4
        %s271 = scalar_lea.vmem %s4, %s270
        %s272 = smul.u32 2, %s26
        %p273 = scmp.lt.s32.totalorder %s24, 0
        %s274 = scalar_select %p273, %s24, 0
        %s275 = smul.addr %s274, 4
        %s276 = scalar_lea.vmem %s1, %s275
        %p277 = scmp.lt.s32.totalorder %s24, 0
        %s278 = scalar_select %p277, %s24, 0
        %s279 = smul.addr %s278, 4
        %s280 = scalar_lea.vmem %s2, %s279
        %p281 = scmp.lt.s32.totalorder %s24, 0
        %s282 = scalar_select %p281, %s24, 0
        %s283 = smul.addr %s282, 4
        %s284 = scalar_lea.vmem %s3, %s283
        %p285 = scmp.lt.s32.totalorder %s24, 0
        %s286 = scalar_select %p285, %s24, 0
        %s287 = smul.addr %s286, 4
        %s288 = scalar_lea.vmem %s4, %s287
        %p289 = scmp.eq.s32.totalorder %s25, 0
        %p290 = scmp.eq.s32.totalorder %s26, 0
        %p291 = pnand %p289, %p290
        %p292 = pneg %p291
        // Predicated region
        $region37: #{tpu_custom_call.1} parent=31 // pred_check
          _
        $region38: #{tpu_custom_call.1} parent=31 // pred_check_branch
          %294 = sbr.rel (%p291) target = $region40
        $region39: #{tpu_custom_call.1} parent=31 // pred_region
          %vm295 = vcmask 3072
          %296 = vst.msk [vmem:[#allocation2] sm:$0xf] %vm295, 0.0
          %297 = vst.msk [vmem:[#allocation3] sm:$0xf] %vm295, 0.0
        $region40: #{tpu_custom_call.1} parent=31 // pred_fallthru
          _
        %v298 = vld [vmem:[%s235] sm:$0xff]
        %v299 = vld [vmem:[#allocation2] sm:$0xf]
        %301 = vst [vmem:[#allocation1] ss:$2 sm:$0xff] %v298
        %v302 = vld.sshfl [vmem:[#allocation1] sm:$0xff pattern:$0x75316420]
        %v303 = vld.sshfl [vmem:[#allocation1 + $0x8] sm:$0xff pattern:$0x75316420]
        %vm306 = vcmask 1043456
        %v307 = vsel %vm306, %v302, 0.0
        %v308 = vsel %vm306, %v303, 0.0
        %v309 = vadd.f32 %v307, %v308
        %310 = vadd.xlane.f32.xlu0 %v309
        %v311 = vpop.xlane.xlu0 %310
        %v312 = vadd.f32 %v299, %v311
        %vm313 = vcmask 3072
        %314 = vst.msk [vmem:[#allocation2] sm:$0xf] %vm313, %v312
        %v315 = vld [vmem:[#allocation3] sm:$0xf]
        %v316 = vmul.f32 %v298, %v298
        %318 = vst [vmem:[#allocation1] ss:$2 sm:$0xff] %v316
        %v319 = vld.sshfl [vmem:[#allocation1] sm:$0xff pattern:$0x75316420]
        %v320 = vld.sshfl [vmem:[#allocation1 + $0x8] sm:$0xff pattern:$0x75316420]
        %v323 = vsel %vm306, %v319, 0.0
        %v324 = vsel %vm306, %v320, 0.0
        %v325 = vadd.f32 %v323, %v324
        %326 = vadd.xlane.f32.xlu0 %v325
        %v327 = vpop.xlane.xlu0 %326
        %v328 = vadd.f32 %v315, %v327
        %329 = vst.msk [vmem:[#allocation3] sm:$0xf] %vm313, %v328
        %p330 = scmp.eq.s32.totalorder %s25, 1
        %p331 = pnand %p330, %p290
        %p332 = pneg %p331
        // Predicated region
        $region41: #{tpu_custom_call.1} parent=31 // pred_check
          _
        $region42: #{tpu_custom_call.1} parent=31 // pred_check_branch
          %334 = sbr.rel (%p331) target = $region44
        $region43: #{tpu_custom_call.1} parent=31 // pred_region
          %v335 = vld [vmem:[#allocation2] sm:$0xf]
          %v336 = vmul.f32 %v335, 0.001953125
          %v337 = vld [vmem:[#allocation3] sm:$0xf]
          %v338 = vmul.f32 %v337, 0.001953125
          %v339 = vmul.f32 %v336, %v336
          %v340 = vsub.f32 %v338, %v339
          %v341 = vmax.f32 %v340, 0.0
          %v342 = vadd.f32 %v341, 1e-05
          %v343 = vrsqrt.pop %v342
          %v344 = vmul.f32 %v343, %v342
          %v345 = vmul.f32 %v344, %v343
          %v346 = vmul.f32 0.5, %v345
          %v347 = vsub.f32 1.5, %v346
          %v348 = vmul.f32 %v343, %v347
          %vm349 = vweird.f32 %v342
          %vm350 = vweird.f32 %v343
          %vm351 = vmor %vm349, %vm350
          %v352 = vsel %vm351, %v343, %v348
          %v353 = vld [vmem:[%s276] sm:$0xf]
          %v354 = vmul.f32 %v353, %v352
          %355 = vst.msk [vmem:[%s284] sm:$0xf] %vm313, %v354
          %v356 = vld [vmem:[%s280] sm:$0xf]
          %v357 = vmul.f32 %v336, %v354
          %v358 = vsub.f32 %v356, %v357
          %359 = vst.msk [vmem:[%s288] sm:$0xf] %vm313, %v358
        $region44: #{tpu_custom_call.1} parent=31 // pred_fallthru
          _
        %p360 = scmp.lt.s32.totalorder %s24, 0
        %s361 = scalar_select %p360, %s24, 0
        %s362 = smul.addr %s361, 4
        %s363 = scalar_lea.vmem %s3, %s362
        %p364 = scmp.lt.s32.totalorder %s24, 0
        %s365 = scalar_select %p364, %s24, 0
        %s366 = smul.addr %s365, 4
        %s367 = scalar_lea.vmem %s4, %s366
        // Predicated region
        $region45: #{tpu_custom_call.1} parent=31 // pred_check
          %p368 = pneg %p138
        $region46: #{tpu_custom_call.1} parent=31 // pred_check_branch
          %370 = sbr.rel (%p368) target = $region48
        $region47: #{tpu_custom_call.1} parent=31 // pred_region
          _
        $region48: #{tpu_custom_call.1} parent=31 // pred_fallthru
          _
        // Predicated region
        $region49: #{tpu_custom_call.1} parent=31 // pred_check
          %p371 = pneg %p164
        $region50: #{tpu_custom_call.1} parent=31 // pred_check_branch
          %373 = sbr.rel (%p371) target = $region52
        $region51: #{tpu_custom_call.1} parent=31 // pred_region
          _
        $region52: #{tpu_custom_call.1} parent=31 // pred_fallthru
          _
        // Predicated region
        $region53: #{tpu_custom_call.1} parent=31 // pred_check
          %p374 = pneg %p138
        $region54: #{tpu_custom_call.1} parent=31 // pred_check_branch
          %376 = sbr.rel (%p374) target = $region56
        $region55: #{tpu_custom_call.1} parent=31 // pred_region
          %p377 = scmp.lt.s32.totalorder %s24, 0
          %s378 = scalar_select %p377, %s24, 0
          %s379 = smul.addr %s378, 4
          %s380 = scalar_lea.vmem %s3, %s379
        $region56: #{tpu_custom_call.1} parent=31 // pred_fallthru
          _
        // Predicated region
        $region57: #{tpu_custom_call.1} parent=31 // pred_check
          %p381 = pneg %p164
        $region58: #{tpu_custom_call.1} parent=31 // pred_check_branch
          %383 = sbr.rel (%p381) target = $region60
        $region59: #{tpu_custom_call.1} parent=31 // pred_region
          %p384 = scmp.lt.s32.totalorder %s24, 0
          %s385 = scalar_select %p384, %s24, 0
          %s386 = smul.addr %s385, 4
          %s387 = scalar_lea.vmem %s4, %s386
        $region60: #{tpu_custom_call.1} parent=31 // pred_fallthru
          _
      $region32: #{tpu_custom_call.1} parent=5 // pred_fallthru
        _
      %p388 = scmp.le.s32.totalorder 2, %s14
      // Predicated region
      $region61: #{tpu_custom_call.1} parent=5 // pred_check
        %p389 = pneg %p388
      $region62: #{tpu_custom_call.1} parent=5 // pred_check_branch
        %391 = sbr.rel (%p389) target = $region64
      $region63: #{tpu_custom_call.1} parent=5 // pred_region
        %s392 = ssub.s32 %s14, 2
      $region64: #{tpu_custom_call.1} parent=5 // pred_fallthru
        _
    $region6: #{tpu_custom_call.1} parent=1 // loop_footer
      %s18 = sadd.s32 1, %s14
    $region7: #{tpu_custom_call.1} parent=1 // loop_footer_branch
      %13 = sbr.rel target = $region3
    $region8: #{tpu_custom_call.1} parent=1 // loop_exit
      _
    %393 = vsyncpa [#allocation5], 1
    %s394 = scalar_lea.sflag [#allocation5], 1
    %395 = vsyncpa %s394, 1

</llo_original>
